<compile_context>
chip_gen: v7x
topology: tpu7x:2x2x1
jax: 0.10.0
libtpu: 0.0.40
codegen_flags: <defaults>
</compile_context>

<pallas_src>
import functools

import jax
import jax.numpy as jnp
from jax import lax
from jax.experimental import pallas as pl
from jax.experimental.pallas import tpu as pltpu

ALPHA = 10.0
BETA = 0.01

CONV_PLANES = [32, 64, 128, 256, 512, 512, 512]
UPCONV_PLANES = [512, 512, 256, 128, 64, 32, 16]
DOWN_KERNEL = [7, 5, 3, 3, 3, 3, 3]            # static per-stage kernel sizes


def _round_up(x, m):
    return (x + m - 1) // m * m


def _cdiv(a, b):
    return -(-a // b)


# ----------------------------------------------------------------------------
# Per-generation tiling configuration
# ----------------------------------------------------------------------------
def _chip_config():
    # Fallback: conservative, works on every generation.
    cfg = dict(vmem_limit=48 * 1024 * 1024, tm=256, tn=256, k_single_max=12288)
    try:
        info = pltpu.get_tpu_info()
        vmem = int(getattr(info, "vmem_capacity_bytes", 0))
        name = str(getattr(info, "chip_version",
                           getattr(info, "version", ""))).lower()
        if vmem >= 100 * 1024 * 1024:
            # 128 MiB VMEM parts (v5e / v6e): big tiles, single K step always.
            cfg = dict(vmem_limit=80 * 1024 * 1024, tm=512, tn=256,
                       k_single_max=16384)
            if "5" in name:                    # v5e MXU is 4x128: TN=256 buys nothing
                cfg["tn"] = 128
        elif vmem > 0:
            # 64 MiB VMEM per core (v7x-class): keep double-buffering headroom.
            cfg = dict(vmem_limit=40 * 1024 * 1024, tm=256, tn=256,
                       k_single_max=12288)
    except Exception:
        pass
    return cfg


_CFG = _chip_config()


def _choose_tiles(M, K, Nout, out_itemsize):
    cfg = _CFG
    # N tile: full dim when narrow (avoids pad-to-128 writes + slice copies).
    if Nout < 128:
        TN = Nout
    elif cfg["tn"] == 256 and Nout % 256 == 0:
        TN = 256
    else:
        TN = 128
    # K: single step whenever it fits the per-chip budget (covers every layer
    # of this network); multi-step fallback for exotic sizes.
    if K <= cfg["k_single_max"]:
        TK, nk = K, 1
    else:
        Kp = _round_up(K, 512)
        TK = max(t for t in (4096, 3072, 2048, 1536, 1024, 512) if Kp % t == 0)
        nk = Kp // TK
    # M tile: start at the per-chip target, shrink until the double-buffered
    # blocks fit the scoped-VMEM budget.
    budget = (cfg["vmem_limit"] * 7) // 10
    TM = cfg["tm"]
    while TM > 64:
        need = (2 * TM * TK * 2 + 2 * TK * TN * 2
                + 2 * TM * TN * out_itemsize
                + (TM * TN * 4 if nk > 1 else 0))
        if need <= budget:
            break
        TM //= 2
    if M <= TM:
        TM = M                                   # full-dim block
    gi, gj = _cdiv(M, TM), _cdiv(Nout, TN)
    if gi == 1 and gj == 1 and M >= 16:
        # Guarantee >=2 tiles on a parallel axis so both v7x TCs get work.
        TM = _round_up(_cdiv(M, 2), 8)
    return TM, TK, TN, nk


# ----------------------------------------------------------------------------
# Pallas kernels: fused matmul + bias + activation (bf16 in, f32 accumulate)
# ----------------------------------------------------------------------------
def _apply_act(r, act):
    if act == "relu":
        return jnp.maximum(r, 0.0)
    if act == "sigmoid_disp":
        return ALPHA * jax.nn.sigmoid(r) + BETA
    return r


def _mm_kernel_single(p_ref, w_ref, b_ref, o_ref, *, act):
    # Single K step: no accumulator scratch, no init phase.
    r = jnp.dot(p_ref[...], w_ref[...], preferred_element_type=jnp.float32)
    r = r + b_ref[...]
    o_ref[...] = _apply_act(r, act).astype(o_ref.dtype)


def _mm_kernel_multi(p_ref, w_ref, b_ref, o_ref, acc_ref, *, act):
    k = pl.program_id(2)

    @pl.when(k == 0)
    def _():
        # Fold the bias into the accumulator init (epilogue add disappears).
        acc_ref[...] = jnp.broadcast_to(b_ref[...], acc_ref.shape)

    acc_ref[...] += jnp.dot(p_ref[...], w_ref[...],
                            preferred_element_type=jnp.float32)

    @pl.when(k == pl.num_programs(2) - 1)
    def _():
        o_ref[...] = _apply_act(acc_ref[...], act).astype(o_ref.dtype)


def matmul_bias_act(patches, w2d, bias, act, out_dtype=jnp.bfloat16):
    """patches: (M, K), w2d: (K, Nout) bf16, bias: (Nout,) or (1, Nout) f32."""
    M, K = patches.shape
    Nout = w2d.shape[1]
    TM, TK, TN, nk = _choose_tiles(M, K, Nout, jnp.dtype(out_dtype).itemsize)

    p = patches.astype(jnp.bfloat16)
    w = w2d.astype(jnp.bfloat16)
    b = bias.astype(jnp.float32).reshape(1, -1)

    if nk == 1:
        grid = (_cdiv(M, TM), _cdiv(Nout, TN))
        in_specs = [
            pl.BlockSpec((TM, K), lambda i, j: (i, 0)),
            pl.BlockSpec((K, TN), lambda i, j: (0, j)),
            pl.BlockSpec((1, TN), lambda i, j: (0, j)),
        ]
        out_specs = pl.BlockSpec((TM, TN), lambda i, j: (i, j))
        scratch = []
        dims = ("parallel", "parallel")
        kern = functools.partial(_mm_kernel_single, act=act)
    else:
        Kp = nk * TK
        if Kp != K:                              # rare fallback path only
            p = jnp.pad(p, ((0, 0), (0, Kp - K)))
            w = jnp.pad(w, ((0, Kp - K), (0, 0)))
        grid = (_cdiv(M, TM), _cdiv(Nout, TN), nk)
        in_specs = [
            pl.BlockSpec((TM, TK), lambda i, j, k: (i, k)),
            pl.BlockSpec((TK, TN), lambda i, j, k: (k, j)),
            pl.BlockSpec((1, TN), lambda i, j, k: (0, j)),
        ]
        out_specs = pl.BlockSpec((TM, TN), lambda i, j, k: (i, j))
        scratch = [pltpu.VMEM((TM, TN), jnp.float32)]
        dims = ("parallel", "parallel", "arbitrary")
        kern = functools.partial(_mm_kernel_multi, act=act)

    return pl.pallas_call(
        kern,
        out_shape=jax.ShapeDtypeStruct((M, Nout), out_dtype),
        grid_spec=pltpu.PrefetchScalarGridSpec(
            num_scalar_prefetch=0,
            grid=grid,
            in_specs=in_specs,
            out_specs=out_specs,
            scratch_shapes=scratch,
        ),
        compiler_params=pltpu.CompilerParams(
            dimension_semantics=dims,
            vmem_limit_bytes=_CFG["vmem_limit"]),
    )(p, w, b)


# ----------------------------------------------------------------------------
# Conv / ConvTranspose / glue (NHWC, bf16 activations)
# ----------------------------------------------------------------------------
def _im2col_nhwc(x, kh, kw, stride, pad):
    """x: (N, H, W, C) -> ((N*OH*OW, kh*kw*C), OH, OW); (kh, kw, c) row order."""
    # TODO(synk): replace with in-kernel patch extraction (implicit GEMM) to
    # remove the kh*kw duplication of activations in HBM.
    if pad:
        x = jnp.pad(x, ((0, 0), (pad, pad), (pad, pad), (0, 0)))
    N, Hp, Wp, C = x.shape
    OH = (Hp - kh) // stride + 1
    OW = (Wp - kw) // stride + 1
    cols = []
    for a in range(kh):
        for b in range(kw):
            cols.append(x[:, a:a + stride * OH:stride,
                          b:b + stride * OW:stride, :])
    patches = jnp.concatenate(cols, axis=-1)            # (N, OH, OW, kh*kw*C)
    return patches.reshape(N * OH * OW, kh * kw * C), OH, OW


def conv2d(x, p, k, stride, padding, act="relu"):
    N = x.shape[0]
    patches, OH, OW = _im2col_nhwc(x, k, k, stride, padding)
    Cout = p["w"].shape[1]
    out = matmul_bias_act(patches, p["w"], p["b"], act)
    return out.reshape(N, OH, OW, Cout)


def upconv_x2(x, p):
    """ConvTranspose2d(k=3, s=2, pad=1, out_pad=1)+ReLU via 4-phase decomposition."""
    # TODO(synk): fold the phase de-interleave into the downstream iconv reads.
    N, H, W, C = x.shape
    xp = jnp.pad(x, ((0, 0), (0, 1), (0, 1), (0, 0)))
    cols = [xp[:, a:a + H, b:b + W, :] for a in (0, 1) for b in (0, 1)]
    patches = jnp.concatenate(cols, axis=-1).reshape(N * H * W, 4 * C)
    out = matmul_bias_act(patches, p["w"], p["b"], "relu")   # (N*H*W, 4*Cout)
    Cout = out.shape[1] // 4
    out = out.reshape(N, H, W, 2, 2, Cout).transpose(0, 1, 3, 2, 4, 5)
    return out.reshape(N, 2 * H, 2 * W, Cout)


def predict_disp(x, p):
    N = x.shape[0]
    patches, OH, OW = _im2col_nhwc(x, 3, 3, 1, 1)
    out = matmul_bias_act(patches, p["w"], p["b"], "sigmoid_disp",
                          out_dtype=jnp.float32)          # (M, 8), col 0 real
    return out[:, :1].reshape(N, OH, OW, 1)


def crop_like(x, ref):
    return x[:, :ref.shape[1], :ref.shape[2], :]


def upsample_bilinear_x2(x):
    """F.interpolate(scale_factor=2, mode='bilinear', align_corners=False), NHWC.

    For scale 2 the taps are the constants (0.75, 0.25): fixed-stencil
    slice + weighted-add interleave, no gathers.
    """
    x = x.astype(jnp.float32)

    def up_axis(v, axis):
        n = v.shape[axis]
        first = lax.slice_in_dim(v, 0, 1, axis=axis)
        last = lax.slice_in_dim(v, n - 1, n, axis=axis)
        prv = jnp.concatenate([first, lax.slice_in_dim(v, 0, n - 1, axis=axis)],
                              axis=axis)
        nxt = jnp.concatenate([lax.slice_in_dim(v, 1, n, axis=axis), last],
                              axis=axis)
        even = 0.75 * v + 0.25 * prv
        odd = 0.75 * v + 0.25 * nxt
        out = jnp.stack([even, odd], axis=axis + 1)
        shp = list(v.shape)
        shp[axis] = 2 * n
        return out.reshape(shp)

    return up_axis(up_axis(x, 1), 2)


# ----------------------------------------------------------------------------
# Parameter init + one-time packing (xavier-uniform weights, zero biases)
# ----------------------------------------------------------------------------
def _xavier(key, shape, fan_in, fan_out):
    bound = (6.0 / (fan_in + fan_out)) ** 0.5
    return jax.random.uniform(key, shape, jnp.float32, -bound, bound)


def _pack_conv(w, b):
    # w: (Cout, Cin, k, k) -> (k*k*Cin, Cout), (kh, kw, cin) row order.
    cout = w.shape[0]
    w2d = w.transpose(2, 3, 1, 0).reshape(-1, cout)
    return {"w": w2d.astype(jnp.bfloat16), "b": b.astype(jnp.float32)}


def _pack_head(w, b):
    # w: (1, Cin, 3, 3) -> (9*Cin, 8); column 0 is the real head, 1..7 zero.
    wv = w.transpose(2, 3, 1, 0).reshape(-1, 1)
    wv = jnp.pad(wv, ((0, 0), (0, 7)))
    bb = jnp.pad(b.reshape(1, 1), ((0, 0), (0, 7)))
    return {"w": wv.astype(jnp.bfloat16), "b": bb.astype(jnp.float32)}


def _pack_deconv(w, b):
    # w: (Cin, Cout, 3, 3) (ConvTranspose layout) -> combined 4-phase weight
    # (2*2*Cin, 4*Cout): 2x2 stride-1 taps -> 4 interleaved output phases.
    cin, cout = w.shape[0], w.shape[1]
    z = jnp.zeros((cin, cout), w.dtype)
    kidx = {(0, 0): 1, (1, 0): 2, (1, 1): 0}     # (out phase, tap) -> kernel idx

    def tap(ph, a, qw, bb):
        if (ph, a) in kidx and (qw, bb) in kidx:
            return w[:, :, kidx[(ph, a)], kidx[(qw, bb)]]
        return z

    rows = []
    for a in range(2):
        for bb in range(2):
            rows.append(jnp.concatenate(
                [tap(ph, a, qw, bb) for ph in range(2) for qw in range(2)],
                axis=1))
    w2d = jnp.concatenate(rows, axis=0)          # (4*Cin, 4*Cout)
    return {"w": w2d.astype(jnp.bfloat16),
            "b": jnp.tile(b, 4).astype(jnp.float32)}


def init_params(key):
    down_specs = [(3, CONV_PLANES[0], 7), (CONV_PLANES[0], CONV_PLANES[1], 5)]
    down_specs += [(CONV_PLANES[i - 1], CONV_PLANES[i], 3) for i in range(2, 7)]
    up_specs = [(CONV_PLANES[6], UPCONV_PLANES[0])]
    up_specs += [(UPCONV_PLANES[i - 1], UPCONV_PLANES[i]) for i in range(1, 7)]
    iconv_specs = [
        (UPCONV_PLANES[0] + CONV_PLANES[5], UPCONV_PLANES[0]),
        (UPCONV_PLANES[1] + CONV_PLANES[4], UPCONV_PLANES[1]),
        (UPCONV_PLANES[2] + CONV_PLANES[3], UPCONV_PLANES[2]),
        (UPCONV_PLANES[3] + CONV_PLANES[2], UPCONV_PLANES[3]),
        (1 + UPCONV_PLANES[4] + CONV_PLANES[1], UPCONV_PLANES[4]),
        (1 + UPCONV_PLANES[5] + CONV_PLANES[0], UPCONV_PLANES[5]),
        (1 + UPCONV_PLANES[6], UPCONV_PLANES[6]),
    ]
    pred_in = [UPCONV_PLANES[3], UPCONV_PLANES[4],
               UPCONV_PLANES[5], UPCONV_PLANES[6]]

    keys = iter(jax.random.split(key, 64))
    params = {}
    for i, (cin, cout, k) in enumerate(down_specs, start=1):
        w0 = _xavier(next(keys), (cout, cin, k, k), cin * k * k, cout * k * k)
        w1 = _xavier(next(keys), (cout, cout, k, k), cout * k * k, cout * k * k)
        zb = jnp.zeros((cout,), jnp.float32)
        params[f"conv{i}_0"] = _pack_conv(w0, zb)
        params[f"conv{i}_1"] = _pack_conv(w1, zb)
    for i, (cin, cout) in zip(range(7, 0, -1), up_specs):
        w = _xavier(next(keys), (cin, cout, 3, 3), cout * 9, cin * 9)
        params[f"upconv{i}"] = _pack_deconv(w, jnp.zeros((cout,), jnp.float32))
    for i, (cin, cout) in zip(range(7, 0, -1), iconv_specs):
        w = _xavier(next(keys), (cout, cin, 3, 3), cin * 9, cout * 9)
        params[f"iconv{i}"] = _pack_conv(w, jnp.zeros((cout,), jnp.float32))
    for i, cin in zip(range(4, 0, -1), pred_in):
        w = _xavier(next(keys), (1, cin, 3, 3), cin * 9, 9)
        params[f"predict_disp{i}"] = _pack_head(w, jnp.zeros((1,), jnp.float32))
    return params


# ----------------------------------------------------------------------------
# Forward pass (training-mode semantics: returns disp1..disp4, NCHW f32)
# ----------------------------------------------------------------------------
def dispnet_forward(params, x):
    x_nhwc = x.transpose(0, 2, 3, 1).astype(jnp.bfloat16)     # NHWC bf16
    h = x_nhwc
    skips = []
    for i in range(1, 8):
        k = DOWN_KERNEL[i - 1]
        pad = (k - 1) // 2
        h = conv2d(h, params[f"conv{i}_0"], k, stride=2, padding=pad)
        h = conv2d(h, params[f"conv{i}_1"], k, stride=1, padding=pad)
        skips.append(h)
    (out_conv1, out_conv2, out_conv3, out_conv4,
     out_conv5, out_conv6, out_conv7) = skips

    def iconv(x_cat, name):
        return conv2d(x_cat, params[name], 3, stride=1, padding=1)

    out_upconv7 = crop_like(upconv_x2(out_conv7, params["upconv7"]), out_conv6)
    out_iconv7 = iconv(jnp.concatenate([out_upconv7, out_conv6], axis=-1),
                       "iconv7")

    out_upconv6 = crop_like(upconv_x2(out_iconv7, params["upconv6"]), out_conv5)
    out_iconv6 = iconv(jnp.concatenate([out_upconv6, out_conv5], axis=-1),
                       "iconv6")

    out_upconv5 = crop_like(upconv_x2(out_iconv6, params["upconv5"]), out_conv4)
    out_iconv5 = iconv(jnp.concatenate([out_upconv5, out_conv4], axis=-1),
                       "iconv5")

    out_upconv4 = crop_like(upconv_x2(out_iconv5, params["upconv4"]), out_conv3)
    out_iconv4 = iconv(jnp.concatenate([out_upconv4, out_conv3], axis=-1),
                       "iconv4")
    disp4 = predict_disp(out_iconv4, params["predict_disp4"])

    out_upconv3 = crop_like(upconv_x2(out_iconv4, params["upconv3"]), out_conv2)
    disp4_up = crop_like(upsample_bilinear_x2(disp4), out_conv2)
    out_iconv3 = iconv(jnp.concatenate(
        [out_upconv3, out_conv2, disp4_up.astype(jnp.bfloat16)], axis=-1),
        "iconv3")
    disp3 = predict_disp(out_iconv3, params["predict_disp3"])

    out_upconv2 = crop_like(upconv_x2(out_iconv3, params["upconv2"]), out_conv1)
    disp3_up = crop_like(upsample_bilinear_x2(disp3), out_conv1)
    out_iconv2 = iconv(jnp.concatenate(
        [out_upconv2, out_conv1, disp3_up.astype(jnp.bfloat16)], axis=-1),
        "iconv2")
    disp2 = predict_disp(out_iconv2, params["predict_disp2"])

    out_upconv1 = crop_like(upconv_x2(out_iconv2, params["upconv1"]), x_nhwc)
    disp2_up = crop_like(upsample_bilinear_x2(disp2), x_nhwc)
    out_iconv1 = iconv(jnp.concatenate(
        [out_upconv1, disp2_up.astype(jnp.bfloat16)], axis=-1), "iconv1")
    disp1 = predict_disp(out_iconv1, params["predict_disp1"])

    def to_nchw(d):
        return d.transpose(0, 3, 1, 2)

    # training-mode return (module default); eval mode would return disp1 only
    return to_nchw(disp1), to_nchw(disp2), to_nchw(disp3), to_nchw(disp4)


if __name__ == "__main__":
    key = jax.random.PRNGKey(0)
    k_param, k_x, k_t = jax.random.split(key, 3)

    # --- quick numerical self-test of the fused matmul kernel ---------------
    tp = jax.random.normal(k_t, (96, 200), jnp.float32)
    tw = jax.random.normal(jax.random.PRNGKey(1), (200, 96), jnp.float32) * 0.05
    tb = jnp.linspace(-0.5, 0.5, 96, dtype=jnp.float32)
    ref = jnp.maximum(
        tp.astype(jnp.bfloat16).astype(jnp.float32)
        @ tw.astype(jnp.bfloat16).astype(jnp.float32) + tb[None, :], 0.0)
    got = matmul_bias_act(tp, tw, tb, "relu", out_dtype=jnp.float32)
    assert bool(jnp.allclose(got, ref, atol=5e-2, rtol=5e-2))

    # --- full DispNetS forward ----------------------------------------------
    params = init_params(k_param)
    # small but architecture-consistent input (survives 7 stride-2 stages)
    x = jax.random.normal(k_x, (2, 3, 32, 32), dtype=jnp.float32)

    fwd = jax.jit(dispnet_forward)
    disp1, disp2, disp3, disp4 = fwd(params, x)
    jax.block_until_ready((disp1, disp2, disp3, disp4))

    assert disp1.shape == (2, 1, 32, 32)
    assert disp2.shape == (2, 1, 16, 16)
    assert disp3.shape == (2, 1, 8, 8)
    assert disp4.shape == (2, 1, 4, 4)
    for d in (disp1, disp2, disp3, disp4):
        assert bool(jnp.all(jnp.isfinite(d)))
        assert bool(jnp.all((d > 0.0) & (d < ALPHA + BETA + 1e-2)))
    print("KERNEL_OK")
</pallas_src>

<mosaic_0001>
module attributes {stable_mosaic.version = 11 : i64} {
  func.func @_mm_kernel_single(%arg0: i32, %arg1: i32, %arg2: memref<48x200xbf16, #tpu.memory_space<vmem>>, %arg3: memref<200x96xbf16, #tpu.memory_space<vmem>>, %arg4: memref<1x96xf32, #tpu.memory_space<vmem>>, %arg5: memref<48x96xf32, #tpu.memory_space<vmem>>) attributes {dimension_semantics = [#tpu.dimension_semantics<parallel>, #tpu.dimension_semantics<parallel>], iteration_bounds = array<i64: 2, 1>, scalar_prefetch = 0 : i64, scratch_operands = 0 : i64, tpu.core_type = #tpu.core_type<tc>, window_params = [{transform_indices = @transform_0, window_bounds = array<i64: 48, 200>}, {transform_indices = @transform_1, window_bounds = array<i64: 200, 96>}, {transform_indices = @transform_2, window_bounds = array<i64: 1, 96>}, {transform_indices = @transform_3, window_bounds = array<i64: 48, 96>}]} {
    %c0 = arith.constant 0 : index
    %c0_0 = arith.constant 0 : index
    %0 = vector.load %arg2[%c0, %c0_0] : memref<48x200xbf16, #tpu.memory_space<vmem>>, vector<48x200xbf16>
    %c0_1 = arith.constant 0 : index
    %c0_2 = arith.constant 0 : index
    %1 = vector.load %arg3[%c0_1, %c0_2] : memref<200x96xbf16, #tpu.memory_space<vmem>>, vector<200x96xbf16>
    %cst = arith.constant dense<0.000000e+00> : vector<48x96xf32>
    %2 = tpu.matmul %0, %1, %cst {dimension_numbers = #tpu.dot_dimension_numbers<[1], [0], [0], [1], [0, 0, 1, 1], [], []>} : vector<48x200xbf16>, vector<200x96xbf16>, vector<48x96xf32> -> vector<48x96xf32>
    %c0_3 = arith.constant 0 : index
    %c0_4 = arith.constant 0 : index
    %3 = vector.load %arg4[%c0_3, %c0_4] : memref<1x96xf32, #tpu.memory_space<vmem>>, vector<1x96xf32>
    %4 = vector.broadcast %3 : vector<1x96xf32> to vector<48x96xf32>
    %5 = arith.addf %2, %4 : vector<48x96xf32>
    %cst_5 = arith.constant 0.000000e+00 : f32
    %6 = vector.broadcast %cst_5 : f32 to vector<48x96xf32>
    %7 = arith.maximumf %5, %6 : vector<48x96xf32>
    %c0_6 = arith.constant 0 : index
    %c0_7 = arith.constant 0 : index
    %8 = vector.load %arg5[%c0_6, %c0_7] : memref<48x96xf32, #tpu.memory_space<vmem>>, vector<48x96xf32>
    tpu.vector_store %arg5[%c0_6, %c0_7], %7 {strides = array<i32>} : memref<48x96xf32, #tpu.memory_space<vmem>>, vector<48x96xf32>,
    return
  }
  func.func @transform_0(%arg0: i32, %arg1: i32) -> (i32, i32) {
    %c0_i32 = arith.constant 0 : i32
    %c0_i32_0 = arith.constant 0 : i32
    return %arg0, %c0_i32 : i32, i32
  }
  func.func @transform_1(%arg0: i32, %arg1: i32) -> (i32, i32) {
    %c0_i32 = arith.constant 0 : i32
    %c0_i32_0 = arith.constant 0 : i32
    return %c0_i32, %arg1 : i32, i32
  }
  func.func @transform_2(%arg0: i32, %arg1: i32) -> (i32, i32) {
    %c0_i32 = arith.constant 0 : i32
    %c0_i32_0 = arith.constant 0 : i32
    return %c0_i32, %arg1 : i32, i32
  }
  func.func @transform_3(%arg0: i32, %arg1: i32) -> (i32, i32) {
    %c0_i32 = arith.constant 0 : i32
    return %arg0, %arg1 : i32, i32
  }
}

</mosaic_0001>

<llo_original>
// kernel: tpu_custom_call.1
$region0: #{tpu_custom_call.1}
  #allocation0 [shape = 'u32[]', space=smem, size = 0x4, offset = 0x4, fixed_abs, tag = 'smem constant byte address 0x4 - core index']
  #allocation1 [shape = 'u32[144,128]{1,0:T(1,128)}', space=vmem, size = 0x12000, scoped, tag = 'internal scratch']
  %s0 = inlined_call_operand.vmem [shape: bf16[96,200], index: 0, kind: input, shape index: {}]
  %s1 = inlined_call_operand.vmem [shape: bf16[200,96], index: 1, kind: input, shape index: {}]
  %s2 = inlined_call_operand.vmem [shape: f32[1,96], index: 2, kind: input, shape index: {}]
  %s3 = inlined_call_operand.hbm [shape: f32[96,96], index: 3, kind: output, shape index: {}]
  %s4 = sld [smem:[#allocation0]]
  $region45: #{tpu_custom_call.1} parent=0
    _
  %s6 = ssub.s32 1, %s4
  %s7 = scalar_select 0, %s6, %s4
  $region1: #{tpu_custom_call.1} parent=0
    #allocation2 [shape = 'u8[49152]{0}', space=vmem, size = 0xc000, scoped, tag = 'output window, operand 0']
    #allocation3 [shape = 's32[2]{0}', space=sflag, size = 0x8, scoped, tag = 'scoped memory for tpu_custom_call.1']
    %8 = vsyncpa [#allocation3], 0
    %s9 = scalar_lea.sflag [#allocation3], 1
    %10 = vsyncpa %s9, 0
    loop: start=0, step=1, limit=4
    $region2: #{tpu_custom_call.1} parent=1 // loop_pre_header
      _
    $region3: #{tpu_custom_call.1} parent=1 // loop_header
      %s12 = sphi 0, %s16
      %p13 = scmp.ge.s32.totalorder %s12, 4
      %s19 = sphi 0, %s31
      %s20 = sphi 0, %s27
      %s21 = sphi 0, %s19
      %s22 = sphi 0, %s20
      %s23 = sphi 0, %s21
      %s24 = sphi 0, %s22
      %s34 = sphi 0, %s36
      %s37 = sphi 0, %s34
      %s38 = sphi 0, %s37
      %s54 = sphi 0, %s38
      %s60 = sphi 0, %s62
      %s63 = sphi 0, %s60
      %s64 = sphi 0, %s63
      %s80 = sphi 0, %s64
      %s86 = sphi 0, %s88
      %s89 = sphi 0, %s86
      %s90 = sphi 0, %s89
      %s106 = sphi 0, %s90
      %s114 = sphi 0, %s116
      %s117 = sphi 0, %s114
      %s118 = sphi 0, %s117
      %s134 = sphi 0, %s118
    $region4: #{tpu_custom_call.1} parent=1 // loop_header_branch
      %15 = sbr.rel (%p13) target = $region8
    $region5: #{tpu_custom_call.1} parent=1 // loop_body
      %s17 = ssub.s32 %s12, 1
      %s18 = ssub.s32 %s12, 2
      %s25 = sadd.s32 1, %s20
      %p26 = scmp.ge.s32.totalorder %s25, 1
      %s27 = scalar_select %p26, 0, %s25
      %s28 = sadd.s32 1, %s19
      %s29 = scalar_select %p26, %s28, %s19
      %p30 = scmp.ge.s32.totalorder %s29, 2
      %s31 = scalar_select %p30, 0, %s29
      %s32 = ssub.s32 %s19, %s31
      %p33 = scmp.eq.s32.totalorder %s32, 0
      %s35 = sadd.s32 %s34, 1
      %s36 = scalar_select %p33, %s34, %s35
      %p39 = pneg %p33
      %p40 = scmp.eq.s32.totalorder %s12, 1
      %p41 = por %p39, %p40
      %p42 = scmp.ne.s32.totalorder %s34, %s37
      %p43 = scmp.eq.s32.totalorder %s12, 0
      %p44 = por %p42, %p43
      %p45 = scmp.ne.s32.totalorder %s34, %s37
      %p46 = scmp.eq.s32.totalorder %s17, 1
      %p47 = por %p45, %p46
      %p48 = scmp.ne.s32.totalorder %s37, %s38
      %p49 = scmp.eq.s32.totalorder %s17, 0
      %p50 = por %p48, %p49
      %p51 = scmp.ne.s32.totalorder %s37, %s38
      %p52 = scmp.eq.s32.totalorder %s18, 1
      %p53 = por %p51, %p52
      %p55 = scmp.ne.s32.totalorder %s38, %s54
      %p56 = scmp.eq.s32.totalorder %s18, 0
      %p57 = por %p55, %p56
      %s58 = ssub.s32 %s20, %s27
      %p59 = scmp.eq.s32.totalorder %s58, 0
      %s61 = sadd.s32 %s60, 1
      %s62 = scalar_select %p59, %s60, %s61
      %p65 = pneg %p59
      %p66 = scmp.eq.s32.totalorder %s12, 1
      %p67 = por %p65, %p66
      %p68 = scmp.ne.s32.totalorder %s60, %s63
      %p69 = scmp.eq.s32.totalorder %s12, 0
      %p70 = por %p68, %p69
      %p71 = scmp.ne.s32.totalorder %s60, %s63
      %p72 = scmp.eq.s32.totalorder %s17, 1
      %p73 = por %p71, %p72
      %p74 = scmp.ne.s32.totalorder %s63, %s64
      %p75 = scmp.eq.s32.totalorder %s17, 0
      %p76 = por %p74, %p75
      %p77 = scmp.ne.s32.totalorder %s63, %s64
      %p78 = scmp.eq.s32.totalorder %s18, 1
      %p79 = por %p77, %p78
      %p81 = scmp.ne.s32.totalorder %s64, %s80
      %p82 = scmp.eq.s32.totalorder %s18, 0
      %p83 = por %p81, %p82
      %s84 = ssub.s32 %s20, %s27
      %p85 = scmp.eq.s32.totalorder %s84, 0
      %s87 = sadd.s32 %s86, 1
      %s88 = scalar_select %p85, %s86, %s87
      %p91 = pneg %p85
      %p92 = scmp.eq.s32.totalorder %s12, 1
      %p93 = por %p91, %p92
      %p94 = scmp.ne.s32.totalorder %s86, %s89
      %p95 = scmp.eq.s32.totalorder %s12, 0
      %p96 = por %p94, %p95
      %p97 = scmp.ne.s32.totalorder %s86, %s89
      %p98 = scmp.eq.s32.totalorder %s17, 1
      %p99 = por %p97, %p98
      %p100 = scmp.ne.s32.totalorder %s89, %s90
      %p101 = scmp.eq.s32.totalorder %s17, 0
      %p102 = por %p100, %p101
      %p103 = scmp.ne.s32.totalorder %s89, %s90
      %p104 = scmp.eq.s32.totalorder %s18, 1
      %p105 = por %p103, %p104
      %p107 = scmp.ne.s32.totalorder %s90, %s106
      %p108 = scmp.eq.s32.totalorder %s18, 0
      %p109 = por %p107, %p108
      %s110 = ssub.s32 %s19, %s31
      %s111 = ssub.s32 %s20, %s27
      %s112 = sor.u32 %s110, %s111
      %p113 = scmp.eq.s32.totalorder %s112, 0
      %s115 = sadd.s32 %s114, 1
      %s116 = scalar_select %p113, %s114, %s115
      %p119 = pneg %p113
      %p120 = scmp.eq.s32.totalorder %s12, 1
      %p121 = por %p119, %p120
      %p122 = scmp.ne.s32.totalorder %s114, %s117
      %p123 = scmp.eq.s32.totalorder %s12, 0
      %p124 = por %p122, %p123
      %p125 = scmp.ne.s32.totalorder %s114, %s117
      %p126 = scmp.eq.s32.totalorder %s17, 1
      %p127 = por %p125, %p126
      %p128 = scmp.ne.s32.totalorder %s117, %s118
      %p129 = scmp.eq.s32.totalorder %s17, 0
      %p130 = por %p128, %p129
      %p131 = scmp.ne.s32.totalorder %s117, %s118
      %p132 = scmp.eq.s32.totalorder %s18, 1
      %p133 = por %p131, %p132
      %p135 = scmp.ne.s32.totalorder %s118, %s134
      %p136 = scmp.eq.s32.totalorder %s18, 0
      %p137 = por %p135, %p136
      %p138 = scmp.le.s32.totalorder 1, %s12
      %p139 = scmp.lt.s32.totalorder %s12, 3
      %p140 = pnand %p138, %p139
      %p141 = pneg %p140
      // Predicated region
      $region9: #{tpu_custom_call.1} parent=5 // pred_check
        _
      $region10: #{tpu_custom_call.1} parent=5 // pred_check_branch
        %143 = sbr.rel (%p140) target = $region12
      $region11: #{tpu_custom_call.1} parent=5 // pred_region
        %s144 = ssub.s32 %s12, 1
        // Predicated region
        $region13: #{tpu_custom_call.1} parent=11 // pred_check
          %p145 = pneg %p76
        $region14: #{tpu_custom_call.1} parent=11 // pred_check_branch
          %147 = sbr.rel (%p145) target = $region16
        $region15: #{tpu_custom_call.1} parent=11 // pred_region
          %p148 = scmp.lt.s32.totalorder %s22, 0
          %s149 = scalar_select %p148, %s22, 0
          %s150 = smul.addr %s149, 4
          %s151 = scalar_lea.vmem %s1, %s150
        $region16: #{tpu_custom_call.1} parent=11 // pred_fallthru
          _
        // Predicated region
        $region17: #{tpu_custom_call.1} parent=11 // pred_check
          %p152 = pneg %p102
        $region18: #{tpu_custom_call.1} parent=11 // pred_check_branch
          %154 = sbr.rel (%p152) target = $region20
        $region19: #{tpu_custom_call.1} parent=11 // pred_region
          %p155 = scmp.lt.s32.totalorder %s22, 0
          %s156 = scalar_select %p155, %s22, 0
          %s157 = scalar_lea.vmem %s2, %s156
        $region20: #{tpu_custom_call.1} parent=11 // pred_fallthru
          _
      $region12: #{tpu_custom_call.1} parent=5 // pred_fallthru
        _
      %p158 = scmp.lt.s32.totalorder %s12, 2
      // Predicated region
      $region21: #{tpu_custom_call.1} parent=5 // pred_check
        %p159 = pneg %p158
      $region22: #{tpu_custom_call.1} parent=5 // pred_check_branch
        %161 = sbr.rel (%p159) target = $region24
      $region23: #{tpu_custom_call.1} parent=5 // pred_region
        // Predicated region
        $region25: #{tpu_custom_call.1} parent=23 // pred_check
          %p162 = pneg %p44
        $region26: #{tpu_custom_call.1} parent=23 // pred_check_branch
          %164 = sbr.rel (%p162) target = $region28
        $region27: #{tpu_custom_call.1} parent=23 // pred_region
          %s165 = smul.u32 6, %s19
          %p166 = scmp.lt.s32.totalorder %s165, 11
          %s167 = scalar_select %p166, %s165, 11
          %s168 = smul.addr %s167, 2
          %s169 = smul.addr %s168, 4
          %s170 = scalar_lea.vmem %s0, %s169
          %s171 = smul.u32 6, %s19
        $region28: #{tpu_custom_call.1} parent=23 // pred_fallthru
          _
      $region24: #{tpu_custom_call.1} parent=5 // pred_fallthru
        _
      %p172 = scmp.le.s32.totalorder 1, %s12
      %p173 = scmp.lt.s32.totalorder %s12, 3
      %p174 = pnand %p172, %p173
      %p175 = pneg %p174
      // Predicated region
      $region29: #{tpu_custom_call.1} parent=5 // pred_check
        _
      $region30: #{tpu_custom_call.1} parent=5 // pred_check_branch
        %177 = sbr.rel (%p174) target = $region32
      $region31: #{tpu_custom_call.1} parent=5 // pred_region
        %s178 = ssub.s32 %s12, 1
        %s179 = smul.u32 6, %s21
        %p180 = scmp.lt.s32.totalorder %s179, 11
        %s181 = scalar_select %p180, %s179, 11
        %s182 = smul.addr %s181, 2
        %s183 = smul.addr %s182, 4
        %s184 = scalar_lea.vmem %s0, %s183
        %p185 = pneg %p50
        %p186 = pneg %p47
        %p187 = scmp.lt.s32.totalorder %s22, 0
        %s188 = scalar_select %p187, %s22, 0
        %s189 = smul.addr %s188, 4
        %s190 = scalar_lea.vmem %s1, %s189
        %p191 = pneg %p76
        %p192 = pneg %p73
        %p193 = scmp.lt.s32.totalorder %s22, 0
        %s194 = scalar_select %p193, %s22, 0
        %s195 = scalar_lea.vmem %s2, %s194
        %p196 = pneg %p102
        %p197 = pneg %p99
        %p198 = pneg %p130
        %p199 = pneg %p127
        %s200 = sand.u32 %s117, 1
        %s201 = scalar_lea.sflag [#allocation3], %s200
        %s202 = sand.u32 %s117, 1
        %s203 = smul.addr %s202, 48
        %s204 = scalar_lea.vmem [#allocation2], %s203
        %s205 = smul.u32 6, %s21
        %p206 = scmp.lt.s32.totalorder %s205, 11
        %s207 = scalar_select %p206, %s205, 11
        %s208 = smul.addr %s207, 2
        %s209 = smul.addr %s208, 4
        %s210 = scalar_lea.vmem %s0, %s209
        %s211 = smul.u32 6, %s21
        %p212 = scmp.lt.s32.totalorder %s22, 0
        %s213 = scalar_select %p212, %s22, 0
        %s214 = smul.addr %s213, 4
        %s215 = scalar_lea.vmem %s1, %s214
        %p216 = scmp.lt.s32.totalorder %s22, 0
        %s217 = scalar_select %p216, %s22, 0
        %s218 = scalar_lea.vmem %s2, %s217
        %s219 = smul.u32 6, %s21
        %v221 = vld [vmem:[%s210] sm:$0xff]
        %v222 = vld [vmem:[%s210 + $0x8] sm:$0xff]
        %v223 = vld [vmem:[%s210 + $0x10] sm:$0xff]
        %v224 = vld [vmem:[%s210 + $0x18] sm:$0xff]
        %v225 = vld [vmem:[%s210 + $0x20] sm:$0xff]
        %v226 = vld [vmem:[%s210 + $0x28] sm:$0xff]
        %v227 = vld [vmem:[%s215] sm:$0xf]
        %v228 = vld [vmem:[%s215 + $0x4] sm:$0xf]
        %v229 = vld [vmem:[%s215 + $0x8] sm:$0xf]
        %v230 = vld [vmem:[%s215 + $0xc] sm:$0xf]
        %v231 = vld [vmem:[%s215 + $0x10] sm:$0xf]
        %v232 = vld [vmem:[%s215 + $0x14] sm:$0xf]
        %v233 = vld [vmem:[%s215 + $0x18] sm:$0xf]
        %v234 = vld [vmem:[%s215 + $0x1c] sm:$0xf]
        %v235 = vld [vmem:[%s215 + $0x20] sm:$0xf]
        %v236 = vld [vmem:[%s215 + $0x24] sm:$0xf]
        %v237 = vld [vmem:[%s215 + $0x28] sm:$0xf]
        %v238 = vld [vmem:[%s215 + $0x2c] sm:$0xf]
        %v239 = vld [vmem:[%s215 + $0x30] sm:$0xf]
        %v240 = vld [vmem:[%s215 + $0x34] sm:$0xf]
        %v241 = vld [vmem:[%s215 + $0x38] sm:$0xf]
        %v242 = vld [vmem:[%s215 + $0x3c] sm:$0xf]
        %v243 = vld [vmem:[%s215 + $0x40] sm:$0xf]
        %v244 = vld [vmem:[%s215 + $0x44] sm:$0xf]
        %v245 = vld [vmem:[%s215 + $0x48] sm:$0xf]
        %v246 = vld [vmem:[%s215 + $0x4c] sm:$0xf]
        %v247 = vld [vmem:[%s215 + $0x50] sm:$0xf]
        %v248 = vld [vmem:[%s215 + $0x54] sm:$0xf]
        %v249 = vld [vmem:[%s215 + $0x58] sm:$0xf]
        %v250 = vld [vmem:[%s215 + $0x5c] sm:$0xf]
        %v251 = vld [vmem:[%s215 + $0x60] sm:$0xf]
        %v252 = vld [vmem:[%s218] sm:$0x1]
        %v254 = vlaneseq
        %v255 = vshrl.u32 %v254, 7
        %v256 = vsub.s32 0, %v255
        %v257 = vrot.slane %v252, %v256
        %v265 = vunpack.c.l.b16 %v221
        %v266 = vunpack.c.h.b16 %v221
        %v267 = vunpack.c.l.b16 %v222
        %v268 = vunpack.c.h.b16 %v222
        %v269 = vunpack.c.l.b16 %v223
        %v270 = vunpack.c.h.b16 %v223
        %v271 = vunpack.c.l.b16 %v224
        %v272 = vunpack.c.h.b16 %v224
        %v273 = vunpack.c.l.b16 %v225
        %v274 = vunpack.c.h.b16 %v225
        %v275 = vunpack.c.l.b16 %v226
        %v276 = vunpack.c.h.b16 %v226
        %v277 = vpack.c.b16 %v267, %v265
        %v278 = vpack.c.b16 %v268, %v266
        %v279 = vpack.c.b16 %v271, %v269
        %v280 = vpack.c.b16 %v272, %v270
        %v281 = vpack.c.b16 %v275, %v273
        %v282 = vpack.c.b16 %v276, %v274
        %v311 = vunpack.c.l.b16 %v227
        %v312 = vunpack.c.l.b16 %v228
        %v313 = vunpack.c.l.b16 %v229
        %v314 = vunpack.c.l.b16 %v230
        %v315 = vunpack.c.l.b16 %v231
        %v316 = vunpack.c.l.b16 %v232
        %v317 = vunpack.c.l.b16 %v233
        %v318 = vunpack.c.l.b16 %v234
        %v319 = vunpack.c.l.b16 %v235
        %v320 = vunpack.c.l.b16 %v236
        %v321 = vunpack.c.l.b16 %v237
        %v322 = vunpack.c.l.b16 %v238
        %v323 = vunpack.c.l.b16 %v239
        %v324 = vunpack.c.l.b16 %v240
        %v325 = vunpack.c.l.b16 %v241
        %v326 = vunpack.c.l.b16 %v242
        %v327 = vunpack.c.l.b16 %v243
        %v328 = vunpack.c.l.b16 %v244
        %v329 = vunpack.c.l.b16 %v245
        %v330 = vunpack.c.l.b16 %v246
        %v331 = vunpack.c.l.b16 %v247
        %v332 = vunpack.c.l.b16 %v248
        %v333 = vunpack.c.l.b16 %v249
        %v334 = vunpack.c.l.b16 %v250
        %v335 = vunpack.c.l.b16 %v251
        %v336 = vpack.c.b16 %v312, %v311
        %v337 = vpack.c.b16 %v314, %v313
        %v338 = vpack.c.b16 %v316, %v315
        %v339 = vpack.c.b16 %v318, %v317
        %v340 = vpack.c.b16 %v320, %v319
        %v341 = vpack.c.b16 %v322, %v321
        %v342 = vpack.c.b16 %v324, %v323
        %v343 = vpack.c.b16 %v326, %v325
        %v344 = vpack.c.b16 %v328, %v327
        %v345 = vpack.c.b16 %v330, %v329
        %v346 = vpack.c.b16 %v332, %v331
        %v347 = vpack.c.b16 %v334, %v333
        %v348 = vpack.c.b16 %v335, %v335
        %vm361 = vcmask 588800
        %v363 = vsel %vm361, %v278, 0
        %v366 = vsel %vm361, %v280, 0
        %v369 = vsel %vm361, %v282, 0
        %vm371 = vcmask 1043456
        %v373 = vsel %vm371, %v348, 0
        %375 = vmatprep.subr.bf16.mxu0 0
        %376 = vmatpush1.bf16.msra.mxu0 %v336
        %377 = vmatprep.subr.bf16.mxu0 0
        %378 = vmatpush1.bf16.msra.mxu0 %v337
        %379 = vmatprep.subr.bf16.mxu0 0
        %380 = vmatpush1.bf16.msra.mxu0 %v338
        %381 = vmatprep.subr.bf16.mxu0 0
        %382 = vmatpush1.bf16.msra.mxu0 %v339
        %383 = vmatprep.subr.bf16.mxu0 0
        %384 = vmatpush1.bf16.msra.mxu0 %v340
        %385 = vmatprep.subr.bf16.mxu0 0
        %386 = vmatpush1.bf16.msra.mxu0 %v341
        %387 = vmatprep.subr.bf16.mxu0 0
        %388 = vmatpush1.bf16.msra.mxu0 %v342
        %389 = vmatprep.subr.bf16.mxu0 0
        %390 = vmatpush1.bf16.msra.mxu0 %v343
        %391 = vmatprep.subr.bf16.mxu0 0
        %392 = vmatpush1.bf16.msra.mxu0 %v344
        %393 = vmatprep.subr.bf16.mxu0 0
        %394 = vmatpush1.bf16.msra.mxu0 %v345
        %395 = vmatprep.subr.bf16.mxu0 0
        %396 = vmatpush1.bf16.msra.mxu0 %v346
        %397 = vmatprep.subr.bf16.mxu0 0
        %398 = vmatpush1.bf16.msra.mxu0 %v347
        %399 = vmatprep.subr.bf16.mxu0 0
        %400 = vmatpush1.bf16.msra.mxu0 %v373
        %401 = vmatprep.subr.bf16.mxu0 0
        %402 = vmatpush1.bf16.msra.mxu0 0
        %403 = vmatprep.subr.bf16.mxu0 0
        %404 = vmatpush1.bf16.msra.mxu0 0
        %405 = vmatprep.subr.bf16.mxu0 0
        %406 = vmatpush1.bf16.msra.mxu0 0
        %407 = vmatprep.mubr.bf16.mxu0 %v363
        %408 = vmatmul.mubr.bf16.gmra.mrb[0].mxu0 %v277
        %v409 = vpop.f32.mrb[0].mxu0
        %v410 = vadd.f32 %v257, %v409
        %v411 = vpop.f32.mrb[0].mxu0
        %v412 = vpop.f32.mrb[0].mxu0
        %v413 = vadd.f32 %v257, %v412
        %v414 = vpop.f32.mrb[0].mxu0
        %415 = vmatprep.mubr.bf16.mxu0 %v366
        %416 = vmatmul.mubr.bf16.gmra.mrb[0].mxu0 %v279
        %v417 = vpop.f32.mrb[0].mxu0
        %v418 = vadd.f32 %v257, %v417
        %v419 = vpop.f32.mrb[0].mxu0
        %v420 = vpop.f32.mrb[0].mxu0
        %v421 = vadd.f32 %v257, %v420
        %v422 = vpop.f32.mrb[0].mxu0
        %423 = vmatprep.mubr.bf16.mxu0 %v369
        %424 = vmatmul.mubr.bf16.gmra.mrb[0].mxu0 %v281
        %v425 = vpop.f32.mrb[0].mxu0
        %v426 = vadd.f32 %v257, %v425
        %v427 = vpop.f32.mrb[0].mxu0
        %v428 = vpop.f32.mrb[0].mxu0
        %v429 = vadd.f32 %v257, %v428
        %v430 = vpop.f32.mrb[0].mxu0
        %431 = vdwg.mxu0
        %v432 = vmax.f32 %v410, 0.0
        %v433 = vmax.f32 %v413, 0.0
        %v434 = vmax.f32 %v418, 0.0
        %v435 = vmax.f32 %v421, 0.0
        %v436 = vmax.f32 %v426, 0.0
        %v437 = vmax.f32 %v429, 0.0
        %vm438 = vcmask 785408
        %439 = vst.msk [vmem:[%s204] sm:$0xff] %vm438, %v432
        %440 = vst.msk [vmem:[%s204 + $0x8] sm:$0xff] %vm438, %v433
        %441 = vst.msk [vmem:[%s204 + $0x10] sm:$0xff] %vm438, %v434
        %442 = vst.msk [vmem:[%s204 + $0x18] sm:$0xff] %vm438, %v435
        %443 = vst.msk [vmem:[%s204 + $0x20] sm:$0xff] %vm438, %v436
        %444 = vst.msk [vmem:[%s204 + $0x28] sm:$0xff] %vm438, %v437
        %s445 = sand.u32 %s117, 1
        %s446 = scalar_lea.sflag [#allocation3], %s445
        %s447 = sand.u32 %s117, 1
        %s448 = smul.addr %s447, 48
        %s449 = scalar_lea.vmem [#allocation2], %s448
        // Predicated region
        $region33: #{tpu_custom_call.1} parent=31 // pred_check
          %p450 = pneg %p127
        $region34: #{tpu_custom_call.1} parent=31 // pred_check_branch
          %452 = sbr.rel (%p450) target = $region36
        $region35: #{tpu_custom_call.1} parent=31 // pred_region
          %s453 = smul.u32 6, %s21
          %s455 = ssub.s32 768, 768
          %456 = vsyncadd %s446, %s455
          %s457 = sadd.s32 %s22, %s453
          %s458 = smul.addr %s457, 128
          %s459 = scalar_lea.hbm %s3, %s458
          %s460 = sshll.u32 %s449, 4
          %s461 = int_to_ptr.vmem [resolvable:$true] %s460
          %466 = dma.vmem_to_hbm [thread:$0]  %s461, 768, %s459, %s446, 128, 128, 8
        $region36: #{tpu_custom_call.1} parent=31 // pred_fallthru
          _
      $region32: #{tpu_custom_call.1} parent=5 // pred_fallthru
        _
      %p467 = scmp.le.s32.totalorder 2, %s12
      // Predicated region
      $region37: #{tpu_custom_call.1} parent=5 // pred_check
        %p468 = pneg %p467
      $region38: #{tpu_custom_call.1} parent=5 // pred_check_branch
        %470 = sbr.rel (%p468) target = $region40
      $region39: #{tpu_custom_call.1} parent=5 // pred_region
        %s471 = ssub.s32 %s12, 2
        // Predicated region
        $region41: #{tpu_custom_call.1} parent=39 // pred_check
          %p472 = pneg %p133
        $region42: #{tpu_custom_call.1} parent=39 // pred_check_branch
          %474 = sbr.rel (%p472) target = $region44
        $region43: #{tpu_custom_call.1} parent=39 // pred_region
          %s475 = sand.u32 %s118, 1
          %s476 = scalar_lea.sflag [#allocation3], %s475
          %s477 = sand.u32 %s118, 1
          %s478 = smul.addr %s477, 48
          %s479 = scalar_lea.vmem [#allocation2], %s478
          %480 = dma.done %s476, 768
        $region44: #{tpu_custom_call.1} parent=39 // pred_fallthru
          _
      $region40: #{tpu_custom_call.1} parent=5 // pred_fallthru
        _
    $region6: #{tpu_custom_call.1} parent=1 // loop_footer
      %s16 = sadd.s32 1, %s12
    $region7: #{tpu_custom_call.1} parent=1 // loop_footer_branch
      %11 = sbr.rel target = $region3
    $region8: #{tpu_custom_call.1} parent=1 // loop_exit
      _
    %481 = vsyncpa [#allocation3], 1
    %s482 = scalar_lea.sflag [#allocation3], 1
    %483 = vsyncpa %s482, 1

</llo_original>
